<compile_context>
chip_gen: v5e
topology: v5e:2x2
jax: 0.10.0
libtpu: 0.0.40
codegen_flags: <defaults>
</compile_context>

<pallas_src>
import jax
import jax.numpy as jnp
from jax.experimental import pallas as pl
from jax.experimental.pallas import tpu as pltpu

_HIDDEN = 30
_LANE = 128
_SUBLANE = 8


def _round_up(x, m):
    return ((x + m - 1) // m) * m


def _mlp_kernel(x_ref, w1_ref, b1_ref, w2_ref, b2_ref, out_ref):
    # fc1: (TB, in) @ (in, 128) on the MXU, f32 accumulation.
    # (K = in_features is tiny so the MXU is underfed here, but fc2 dominates
    #  compute; a VPU broadcast-FMA variant is possible if this ever matters.)
    h = jnp.dot(x_ref[...], w1_ref[...], preferred_element_type=jnp.float32)
    h = jnp.maximum(h + b1_ref[...], 0.0)                 # bias + ReLU (VPU)
    # fc2: (TB, 128) @ (128, A) -> store at true width (no 128-lane padded
    # slab; kills output HBM write amplification + wrapper re-read).
    q = jnp.dot(h.astype(w2_ref.dtype), w2_ref[...],
                preferred_element_type=jnp.float32)
    out_ref[...] = (q + b2_ref[...]).astype(out_ref.dtype)


def prepare_params(w1, b1, w2, b2, dtype=jnp.float32):
    """Pad parameters once on the host to MXU/lane-friendly shapes.

    w1 (in, 30) -> (in, 128)   b1 (30,) -> (1, 128)  [bias kept f32]
    w2 (30, A)  -> (128, A)    b2 (A,)  -> (1, A)    [bias kept f32]
    Hidden-dim zero padding is exact: padded hidden units are relu(0) = 0 and
    hit zero rows of w2.  Pass dtype=jnp.bfloat16 on v5e (bf16-native MXU,
    halves input DMA) if Q-value tolerance allows; default f32 preserves the
    PyTorch semantics exactly.
    """
    in_features, hidden = w1.shape
    nb_action = w2.shape[1]
    h_pad = _round_up(hidden, _LANE)

    w1p = jnp.zeros((in_features, h_pad), dtype).at[:, :hidden].set(
        jnp.asarray(w1, dtype))
    b1p = jnp.zeros((1, h_pad), jnp.float32).at[0, :hidden].set(
        jnp.asarray(b1, jnp.float32))
    w2p = jnp.zeros((h_pad, nb_action), dtype).at[:hidden, :].set(
        jnp.asarray(w2, dtype))
    b2p = jnp.asarray(b2, jnp.float32).reshape(1, nb_action)
    return (w1p, b1p, w2p, b2p, in_features, nb_action, dtype)


def _choose_batch_tile(batch, cap):
    """Adaptive batch tile: multiple of 8, capped for VMEM, >=2 grid steps for
    moderate batches (feeds both v7x TensorCores), minimal padding waste."""
    cap = max(_SUBLANE, _round_up(cap, _SUBLANE))
    min_steps = 2 if batch >= 256 else 1
    steps = max(min_steps, pl.cdiv(batch, cap))
    tb = _round_up(pl.cdiv(batch, steps), _SUBLANE)
    return min(tb, cap)


def network_forward(state, params, *, batch_tile=2048):
    """Q-value forward pass.

    state:  (B, input_size)
    params: output of prepare_params(...)
    returns (B, nb_action) f32
    """
    w1p, b1p, w2p, b2p, in_features, nb_action, dtype = params
    h_pad = w1p.shape[1]
    B = state.shape[0]
    assert state.shape[1] == in_features

    tb = _choose_batch_tile(B, batch_tile)
    b_pad = _round_up(B, tb)

    x = state.astype(dtype)          # no-op when already dtype
    if b_pad != B:
        # Pad only the batch tail. NOTE: padded rows yield relu(b1)@w2 + b2
        # (not zeros); they are sliced off below and never exposed.
        x = jnp.pad(x, ((0, b_pad - B), (0, 0)))

    grid = (b_pad // tb,)
    flops = 2 * b_pad * (in_features * h_pad + h_pad * nb_action)
    itemsize = jnp.dtype(dtype).itemsize
    bytes_accessed = (itemsize * (b_pad * in_features + w1p.size + w2p.size)
                      + 4 * (b_pad * nb_action + b1p.size + b2p.size))

    out = pl.pallas_call(
        _mlp_kernel,
        out_shape=jax.ShapeDtypeStruct((b_pad, nb_action), jnp.float32),
        grid=grid,
        in_specs=[
            pl.BlockSpec((tb, in_features), lambda i: (i, 0)),      # state tile
            pl.BlockSpec((in_features, h_pad), lambda i: (0, 0)),   # w1 resident
            pl.BlockSpec((1, h_pad), lambda i: (0, 0)),             # b1 resident
            pl.BlockSpec((h_pad, nb_action), lambda i: (0, 0)),     # w2 resident
            pl.BlockSpec((1, nb_action), lambda i: (0, 0)),         # b2 resident
        ],
        out_specs=pl.BlockSpec((tb, nb_action), lambda i: (i, 0)),  # true width
        compiler_params=pltpu.CompilerParams(
            dimension_semantics=("parallel",),
            vmem_limit_bytes=32 * 1024 * 1024),
        cost_estimate=pl.CostEstimate(
            flops=flops, transcendentals=0, bytes_accessed=bytes_accessed),
    )(x, w1p, b1p, w2p, b2p)

    if b_pad != B:
        out = out[:B]
    return out


def init_params(key, input_size, nb_action, hidden=_HIDDEN):
    """Mimics nn.Linear's U(-1/sqrt(fan_in), 1/sqrt(fan_in)) init.

    Weights stored as (in, out) so the kernel computes x @ W directly.
    """
    k1, k2, k3, k4 = jax.random.split(key, 4)
    bound1 = 1.0 / jnp.sqrt(jnp.float32(input_size))
    bound2 = 1.0 / jnp.sqrt(jnp.float32(hidden))
    w1 = jax.random.uniform(k1, (input_size, hidden), jnp.float32, -bound1, bound1)
    b1 = jax.random.uniform(k2, (hidden,), jnp.float32, -bound1, bound1)
    w2 = jax.random.uniform(k3, (hidden, nb_action), jnp.float32, -bound2, bound2)
    b2 = jax.random.uniform(k4, (nb_action,), jnp.float32, -bound2, bound2)
    return w1, b1, w2, b2


if __name__ == "__main__":
    input_size = 8
    nb_action = 4
    batch = 4

    key = jax.random.PRNGKey(0)
    k_params, k_state = jax.random.split(key)
    w1, b1, w2, b2 = init_params(k_params, input_size, nb_action)
    params = prepare_params(w1, b1, w2, b2)

    def reference(s):
        return jnp.maximum(s @ w1 + b1, 0.0) @ w2 + b2

    # Small batch (single padded tile).
    state = jax.random.normal(k_state, (batch, input_size), jnp.float32)
    q_values = jax.block_until_ready(network_forward(state, params))
    assert q_values.shape == (batch, nb_action)
    assert jnp.allclose(q_values, reference(state), atol=1e-5), "mismatch (small)"

    # Tile-aligned moderate batch: 2 grid steps, no padding, no slicing.
    big_state = jax.random.normal(k_state, (1536, input_size), jnp.float32)
    big_q = jax.block_until_ready(network_forward(big_state, params))
    assert big_q.shape == (1536, nb_action)
    assert jnp.allclose(big_q, reference(big_state), atol=1e-4), "mismatch (big)"

    # Ragged batch: exercises tail-padding + final row slice.
    rag_state = jax.random.normal(k_state, (300, input_size), jnp.float32)
    rag_q = jax.block_until_ready(network_forward(rag_state, params))
    assert rag_q.shape == (300, nb_action)
    assert jnp.allclose(rag_q, reference(rag_state), atol=1e-4), "mismatch (ragged)"

    print("KERNEL_OK")
</pallas_src>

<mosaic_0001>
module attributes {stable_mosaic.version = 11 : i64} {
  func.func @_mlp_kernel(%arg0: i32, %arg1: memref<8x8xf32, #tpu.memory_space<vmem>>, %arg2: memref<8x128xf32, #tpu.memory_space<vmem>>, %arg3: memref<1x128xf32, #tpu.memory_space<vmem>>, %arg4: memref<128x4xf32, #tpu.memory_space<vmem>>, %arg5: memref<1x4xf32, #tpu.memory_space<vmem>>, %arg6: memref<8x4xf32, #tpu.memory_space<vmem>>) attributes {dimension_semantics = [#tpu.dimension_semantics<parallel>], iteration_bounds = array<i64: 1>, scalar_prefetch = 0 : i64, scratch_operands = 0 : i64, tpu.core_type = #tpu.core_type<tc>, window_params = [{transform_indices = @transform_0, window_bounds = array<i64: 8, 8>}, {pipeline_mode = #tpu.pipeline_mode<synchronous>, transform_indices = @transform_1, window_bounds = array<i64: 8, 128>}, {pipeline_mode = #tpu.pipeline_mode<synchronous>, transform_indices = @transform_2, window_bounds = array<i64: 1, 128>}, {pipeline_mode = #tpu.pipeline_mode<synchronous>, transform_indices = @transform_3, window_bounds = array<i64: 128, 4>}, {pipeline_mode = #tpu.pipeline_mode<synchronous>, transform_indices = @transform_4, window_bounds = array<i64: 1, 4>}, {transform_indices = @transform_5, window_bounds = array<i64: 8, 4>}]} {
    %c0 = arith.constant 0 : index
    %c0_0 = arith.constant 0 : index
    %0 = vector.load %arg1[%c0, %c0_0] : memref<8x8xf32, #tpu.memory_space<vmem>>, vector<8x8xf32>
    %c0_1 = arith.constant 0 : index
    %c0_2 = arith.constant 0 : index
    %1 = vector.load %arg2[%c0_1, %c0_2] : memref<8x128xf32, #tpu.memory_space<vmem>>, vector<8x128xf32>
    %cst = arith.constant dense<0.000000e+00> : vector<8x128xf32>
    %2 = tpu.matmul %0, %1, %cst {dimension_numbers = #tpu.dot_dimension_numbers<[1], [0], [0], [1], [0, 0, 1, 1], [], []>} : vector<8x8xf32>, vector<8x128xf32>, vector<8x128xf32> -> vector<8x128xf32>
    %c0_3 = arith.constant 0 : index
    %c0_4 = arith.constant 0 : index
    %3 = vector.load %arg3[%c0_3, %c0_4] : memref<1x128xf32, #tpu.memory_space<vmem>>, vector<1x128xf32>
    %4 = vector.broadcast %3 : vector<1x128xf32> to vector<8x128xf32>
    %5 = arith.addf %2, %4 : vector<8x128xf32>
    %cst_5 = arith.constant 0.000000e+00 : f32
    %6 = vector.broadcast %cst_5 : f32 to vector<8x128xf32>
    %7 = arith.maximumf %5, %6 : vector<8x128xf32>
    %c0_6 = arith.constant 0 : index
    %c0_7 = arith.constant 0 : index
    %8 = vector.load %arg4[%c0_6, %c0_7] : memref<128x4xf32, #tpu.memory_space<vmem>>, vector<128x4xf32>
    %cst_8 = arith.constant dense<0.000000e+00> : vector<8x4xf32>
    %9 = tpu.matmul %7, %8, %cst_8 {dimension_numbers = #tpu.dot_dimension_numbers<[1], [0], [0], [1], [0, 0, 1, 1], [], []>} : vector<8x128xf32>, vector<128x4xf32>, vector<8x4xf32> -> vector<8x4xf32>
    %c0_9 = arith.constant 0 : index
    %c0_10 = arith.constant 0 : index
    %10 = vector.load %arg5[%c0_9, %c0_10] : memref<1x4xf32, #tpu.memory_space<vmem>>, vector<1x4xf32>
    %11 = vector.broadcast %10 : vector<1x4xf32> to vector<8x4xf32>
    %12 = arith.addf %9, %11 : vector<8x4xf32>
    %c0_11 = arith.constant 0 : index
    %c0_12 = arith.constant 0 : index
    %13 = vector.load %arg6[%c0_11, %c0_12] : memref<8x4xf32, #tpu.memory_space<vmem>>, vector<8x4xf32>
    tpu.vector_store %arg6[%c0_11, %c0_12], %12 {strides = array<i32>} : memref<8x4xf32, #tpu.memory_space<vmem>>, vector<8x4xf32>,
    return
  }
  func.func @transform_0(%arg0: i32) -> (i32, i32) {
    %c0_i32 = arith.constant 0 : i32
    %c0_i32_0 = arith.constant 0 : i32
    return %arg0, %c0_i32 : i32, i32
  }
  func.func @transform_1(%arg0: i32) -> (i32, i32) {
    %c0_i32 = arith.constant 0 : i32
    %c0_i32_0 = arith.constant 0 : i32
    %c0_i32_1 = arith.constant 0 : i32
    return %c0_i32, %c0_i32_0 : i32, i32
  }
  func.func @transform_2(%arg0: i32) -> (i32, i32) {
    %c0_i32 = arith.constant 0 : i32
    %c0_i32_0 = arith.constant 0 : i32
    %c0_i32_1 = arith.constant 0 : i32
    return %c0_i32, %c0_i32_0 : i32, i32
  }
  func.func @transform_3(%arg0: i32) -> (i32, i32) {
    %c0_i32 = arith.constant 0 : i32
    %c0_i32_0 = arith.constant 0 : i32
    %c0_i32_1 = arith.constant 0 : i32
    return %c0_i32, %c0_i32_0 : i32, i32
  }
  func.func @transform_4(%arg0: i32) -> (i32, i32) {
    %c0_i32 = arith.constant 0 : i32
    %c0_i32_0 = arith.constant 0 : i32
    %c0_i32_1 = arith.constant 0 : i32
    return %c0_i32, %c0_i32_0 : i32, i32
  }
  func.func @transform_5(%arg0: i32) -> (i32, i32) {
    %c0_i32 = arith.constant 0 : i32
    %c0_i32_0 = arith.constant 0 : i32
    return %arg0, %c0_i32 : i32, i32
  }
}

</mosaic_0001>

<llo_original>
// kernel: tpu_custom_call.1
$region0: #{tpu_custom_call.1}
  #allocation0 [shape = 'u32[]', space=smem, size = 0x4, offset = 0x4, fixed_abs, tag = 'smem constant byte address 0x4 - core index']
  #allocation1 [shape = 'u32[72,128]{1,0:T(1,128)}', space=vmem, size = 0x9000, scoped, tag = 'internal scratch']
  %s0 = inlined_call_operand.vmem [shape: f32[8,8], index: 0, kind: input, shape index: {}]
  %s1 = inlined_call_operand.vmem [shape: f32[8,128], index: 1, kind: input, shape index: {}]
  %s2 = inlined_call_operand.vmem [shape: f32[1,128], index: 2, kind: input, shape index: {}]
  %s3 = inlined_call_operand.vmem [shape: f32[128,4], index: 3, kind: input, shape index: {}]
  %s4 = inlined_call_operand.vmem [shape: f32[1,4], index: 4, kind: input, shape index: {}]
  %s5 = inlined_call_operand.vmem [shape: f32[8,4], index: 5, kind: output, shape index: {}]
  %s6 = sld [smem:[#allocation0]]
  $region30: #{tpu_custom_call.1} parent=0
    _
  %s8 = ssub.s32 1, %s6
  %s9 = scalar_select 0, %s8, %s6
  // Predicated region
  $region2: #{tpu_custom_call.1} parent=0 // pred_check
    _
  $region3: #{tpu_custom_call.1} parent=0 // pred_check_branch
    %11 = sbr.rel (0) target = $region5
  $region4: #{tpu_custom_call.1} parent=0 // pred_region
    _
  $region5: #{tpu_custom_call.1} parent=0 // pred_fallthru
    _
  // Predicated region
  $region6: #{tpu_custom_call.1} parent=0 // pred_check
    _
  $region7: #{tpu_custom_call.1} parent=0 // pred_check_branch
    %13 = sbr.rel (0) target = $region9
  $region8: #{tpu_custom_call.1} parent=0 // pred_region
    _
  $region9: #{tpu_custom_call.1} parent=0 // pred_fallthru
    _
  // Predicated region
  $region10: #{tpu_custom_call.1} parent=0 // pred_check
    _
  $region11: #{tpu_custom_call.1} parent=0 // pred_check_branch
    %15 = sbr.rel (0) target = $region13
  $region12: #{tpu_custom_call.1} parent=0 // pred_region
    _
  $region13: #{tpu_custom_call.1} parent=0 // pred_fallthru
    _
  // Predicated region
  $region14: #{tpu_custom_call.1} parent=0 // pred_check
    _
  $region15: #{tpu_custom_call.1} parent=0 // pred_check_branch
    %17 = sbr.rel (0) target = $region17
  $region16: #{tpu_custom_call.1} parent=0 // pred_region
    _
  $region17: #{tpu_custom_call.1} parent=0 // pred_fallthru
    _
  // Predicated region
  $region18: #{tpu_custom_call.1} parent=0 // pred_check
    _
  $region19: #{tpu_custom_call.1} parent=0 // pred_check_branch
    %19 = sbr.rel (0) target = $region21
  $region20: #{tpu_custom_call.1} parent=0 // pred_region
    _
  $region21: #{tpu_custom_call.1} parent=0 // pred_fallthru
    _
  %v20 = vld [vmem:[%s0] sm:$0xff]
  %v21 = vld [vmem:[%s1] sm:$0xff]
  %v22 = vld [vmem:[%s2] sm:$0x1]
  %v24 = vperm.slane %v22, 0
  %vm26 = vcmask 64512
  %v28 = vsel %vm26, %v20, 0
  %30 = vmatpush.msra.mxu0 0.0
  %31 = vmatpush.msra.mxu0 0.0
  %32 = vmatpush.msra.mxu0 0.0
  %33 = vmatpush.msra.mxu0 0.0
  %34 = vmatpush.msra.mxu0 0.0
  %35 = vmatpush.msra.mxu0 0.0
  %36 = vmatpush.msra.mxu0 0.0
  %37 = vmatpush.msra.mxu0 0.0
  %38 = vmatpush.msra.mxu0 0.0
  %39 = vmatpush.msra.mxu0 0.0
  %40 = vmatpush.msra.mxu0 0.0
  %41 = vmatpush.msra.mxu0 0.0
  %42 = vmatpush.msra.mxu0 0.0
  %43 = vmatpush.msra.mxu0 0.0
  %44 = vmatpush.msra.mxu0 0.0
  %45 = vmatpush.msra.mxu0 %v21
  %46 = vmatmul.f32.gmra.mxu0 %v28
  %v47 = vpop.f32.mrf.mxu0
  %v48 = vadd.f32 %v24, %v47
  %49 = vdwg.mxu0
  %v50 = vmax.f32 %v48, 0.0
  %v51 = vld [vmem:[%s3] sm:$0xff]
  %v52 = vld [vmem:[%s3 + $0x8] sm:$0xff]
  %v53 = vld [vmem:[%s3 + $0x10] sm:$0xff]
  %v54 = vld [vmem:[%s3 + $0x18] sm:$0xff]
  %v55 = vld [vmem:[%s3 + $0x20] sm:$0xff]
  %v56 = vld [vmem:[%s3 + $0x28] sm:$0xff]
  %v57 = vld [vmem:[%s3 + $0x30] sm:$0xff]
  %v58 = vld [vmem:[%s3 + $0x38] sm:$0xff]
  %v59 = vld [vmem:[%s3 + $0x40] sm:$0xff]
  %v60 = vld [vmem:[%s3 + $0x48] sm:$0xff]
  %v61 = vld [vmem:[%s3 + $0x50] sm:$0xff]
  %v62 = vld [vmem:[%s3 + $0x58] sm:$0xff]
  %v63 = vld [vmem:[%s3 + $0x60] sm:$0xff]
  %v64 = vld [vmem:[%s3 + $0x68] sm:$0xff]
  %v65 = vld [vmem:[%s3 + $0x70] sm:$0xff]
  %v66 = vld [vmem:[%s3 + $0x78] sm:$0xff]
  %v67 = vld [vmem:[%s4] sm:$0x1]
  %v69 = vperm.slane %v67, 0
  %71 = vmatpush.msra.mxu0 %v66
  %72 = vmatpush.msra.mxu0 %v65
  %73 = vmatpush.msra.mxu0 %v64
  %74 = vmatpush.msra.mxu0 %v63
  %75 = vmatpush.msra.mxu0 %v62
  %76 = vmatpush.msra.mxu0 %v61
  %77 = vmatpush.msra.mxu0 %v60
  %78 = vmatpush.msra.mxu0 %v59
  %79 = vmatpush.msra.mxu0 %v58
  %80 = vmatpush.msra.mxu0 %v57
  %81 = vmatpush.msra.mxu0 %v56
  %82 = vmatpush.msra.mxu0 %v55
  %83 = vmatpush.msra.mxu0 %v54
  %84 = vmatpush.msra.mxu0 %v53
  %85 = vmatpush.msra.mxu0 %v52
  %86 = vmatpush.msra.mxu0 %v51
  %87 = vmatmul.f32.gmra.mxu0 %v50
  %v88 = vpop.f32.mrf.mxu0
  %v89 = vadd.f32 %v69, %v88
  %90 = vdwg.mxu0
  %vm91 = vcmask 31744
  %92 = vst.msk [vmem:[%s5] sm:$0xff] %vm91, %v89
  // Predicated region
  $region22: #{tpu_custom_call.1} parent=0 // pred_check
    _
  $region23: #{tpu_custom_call.1} parent=0 // pred_check_branch
    %94 = sbr.rel (0) target = $region25
  $region24: #{tpu_custom_call.1} parent=0 // pred_region
    _
  $region25: #{tpu_custom_call.1} parent=0 // pred_fallthru
    _
  // Predicated region
  $region26: #{tpu_custom_call.1} parent=0 // pred_check
    _
  $region27: #{tpu_custom_call.1} parent=0 // pred_check_branch
    %96 = sbr.rel (0) target = $region29
  $region28: #{tpu_custom_call.1} parent=0 // pred_region
    _
  $region29: #{tpu_custom_call.1} parent=0 // pred_fallthru
    _

</llo_original>
